<compile_context>
chip_gen: v7x
topology: tpu7x:2x2x1
jax: 0.10.0
libtpu: 0.0.40
codegen_flags: <defaults>
</compile_context>

<pallas_src>
import functools

import jax
import jax.numpy as jnp
import numpy as np
from jax.experimental import pallas as pl
from jax.experimental.pallas import tpu as pltpu

_LANE = 128
_SUBLANE = 8
# Scoped-VMEM ceiling we request.  Safe on v5e/v6e (128 MiB physical) and
# v7x (64 MiB physical).  Tile budgets below keep 2*in + 2*out + weights
# comfortably under this.
_VMEM_LIMIT_BYTES = 32 * 1024 * 1024


def _round_up(x, m):
    return ((x + m - 1) // m) * m


def _pick_spatial_tile(S, C, itemsize, budget_bytes):
    """Largest multiple-of-8 divisor of S whose (TS, C) tile fits the byte budget."""
    cap = min(S, max(_SUBLANE, budget_bytes // (C * itemsize)))
    cap = (cap // _SUBLANE) * _SUBLANE
    for ts in range(cap, _SUBLANE - 1, -_SUBLANE):
        if S % ts == 0:
            return ts
    return S  # full-extent block (exempt from the 8-divisibility rule)


# ----------------------------------------------------------------------------
# Kernel bodies
# ----------------------------------------------------------------------------
def _se_gate_from_mean(mean, w1, w2):
    """sigmoid(relu(mean @ w1) @ w2) for a (1, C) f32 mean -> (1, C) f32 gate."""
    c = mean.shape[1]
    # Broadcast the single row to a full sublane group so the MXU sees an
    # aligned M dim; all 8 rows are identical, we keep row 0.
    mean8 = jnp.broadcast_to(mean, (_SUBLANE, c))
    h = jnp.maximum(jnp.dot(mean8, w1, preferred_element_type=jnp.float32), 0.0)
    g = jax.nn.sigmoid(jnp.dot(h, w2, preferred_element_type=jnp.float32))
    return g[0:1, :]


def _se_fused_kernel(x_ref, w1_ref, w2_ref, o_ref, *, inv_s):
    # x_ref: (S, C) — whole per-batch volume resident in VMEM.
    # Two cheap VMEM reads of x_ref instead of one value held live across the
    # gate computation (keeps vreg pressure flat).
    mean = jnp.sum(x_ref[...].astype(jnp.float32), axis=0, keepdims=True) * inv_s
    gate = _se_gate_from_mean(mean, w1_ref[...], w2_ref[...])        # (1, C) f32
    o_ref[...] = (x_ref[...] * gate).astype(o_ref.dtype)


def _se_pool_gate_kernel(x_ref, w1_ref, w2_ref, g_ref, *, inv_s):
    # Accumulate the channel-wise sum directly in the (1, C) f32 output block
    # (revisited across the s axis), then turn it into the sigmoid gate on the
    # last step.
    s = pl.program_id(1)

    @pl.when(s == 0)
    def _():
        g_ref[...] = jnp.zeros_like(g_ref)

    g_ref[...] += jnp.sum(x_ref[...].astype(jnp.float32), axis=0, keepdims=True)

    @pl.when(s == pl.num_programs(1) - 1)
    def _():
        mean = g_ref[...] * inv_s
        g_ref[...] = _se_gate_from_mean(mean, w1_ref[...], w2_ref[...])


def _se_scale_kernel(x_ref, g_ref, o_ref):
    o_ref[...] = (x_ref[...] * g_ref[...]).astype(o_ref.dtype)


# ----------------------------------------------------------------------------
# Wrapper
# ----------------------------------------------------------------------------
def se_layer(x, w1, w2, *, tile_budget_bytes=4 * 1024 * 1024):
    """SELayer forward.  x: (N, D, H, W, C) channels-last; w1: (C, C//r); w2: (C//r, C)."""
    N, D, H, W, C = x.shape
    S = D * H * W
    hidden = w1.shape[1]
    assert w1.shape == (C, hidden) and w2.shape == (hidden, C)

    # Pad the hidden dim once to lane width (exact no-op units), keep FCs in f32.
    Hp = _round_up(hidden, _LANE)
    w1p = jnp.pad(w1.astype(jnp.float32), ((0, 0), (0, Hp - hidden)))
    w2p = jnp.pad(w2.astype(jnp.float32), ((0, Hp - hidden), (0, 0)))

    xr = x.reshape(N, S, C)                 # metadata-only reshape, no HBM pass
    inv_s = 1.0 / float(S)
    itemsize = jnp.dtype(x.dtype).itemsize
    block_bytes = S * C * itemsize
    cparams = dict(vmem_limit_bytes=_VMEM_LIMIT_BYTES)

    if block_bytes <= tile_budget_bytes:
        # Fully fused: one HBM read of x, one write.  Grid only over batch.
        out = pl.pallas_call(
            functools.partial(_se_fused_kernel, inv_s=inv_s),
            out_shape=jax.ShapeDtypeStruct((N, S, C), x.dtype),
            grid_spec=pltpu.PrefetchScalarGridSpec(
                num_scalar_prefetch=0,
                grid=(N,),
                in_specs=[
                    pl.BlockSpec((None, S, C), lambda n: (n, 0, 0)),
                    pl.BlockSpec((C, Hp), lambda n: (0, 0)),
                    pl.BlockSpec((Hp, C), lambda n: (0, 0)),
                ],
                out_specs=pl.BlockSpec((None, S, C), lambda n: (n, 0, 0)),
            ),
            compiler_params=pltpu.CompilerParams(
                dimension_semantics=("parallel",), **cparams),
        )(xr, w1p, w2p)
    else:
        # Tiled fallback: adaptive spatial tile, no activation padding.
        TS = _pick_spatial_tile(S, C, itemsize, tile_budget_bytes)
        n_s = S // TS

        gate = pl.pallas_call(
            functools.partial(_se_pool_gate_kernel, inv_s=inv_s),
            out_shape=jax.ShapeDtypeStruct((N, 1, C), jnp.float32),
            grid_spec=pltpu.PrefetchScalarGridSpec(
                num_scalar_prefetch=0,
                grid=(N, n_s),
                in_specs=[
                    pl.BlockSpec((None, TS, C), lambda n, s: (n, s, 0)),
                    pl.BlockSpec((C, Hp), lambda n, s: (0, 0)),   # VMEM-resident
                    pl.BlockSpec((Hp, C), lambda n, s: (0, 0)),   # VMEM-resident
                ],
                out_specs=pl.BlockSpec((None, 1, C), lambda n, s: (n, 0, 0)),
            ),
            compiler_params=pltpu.CompilerParams(
                dimension_semantics=("parallel", "arbitrary"), **cparams),
        )(xr, w1p, w2p)

        out = pl.pallas_call(
            _se_scale_kernel,
            out_shape=jax.ShapeDtypeStruct((N, S, C), x.dtype),
            grid_spec=pltpu.PrefetchScalarGridSpec(
                num_scalar_prefetch=0,
                grid=(N, n_s),
                in_specs=[
                    pl.BlockSpec((None, TS, C), lambda n, s: (n, s, 0)),
                    pl.BlockSpec((None, 1, C), lambda n, s: (n, 0, 0)),
                ],
                out_specs=pl.BlockSpec((None, TS, C), lambda n, s: (n, s, 0)),
            ),
            compiler_params=pltpu.CompilerParams(
                dimension_semantics=("parallel", "parallel"), **cparams),
        )(xr, gate)

    return out.reshape(N, D, H, W, C)


def _reference(x, w1, w2):
    y = x.mean(axis=(1, 2, 3))
    y = jnp.maximum(y @ w1, 0.0)
    y = jax.nn.sigmoid(y @ w2)
    return x * y[:, None, None, None, :]


# ----------------------------------------------------------------------------
if __name__ == "__main__":
    key = jax.random.PRNGKey(0)
    se_fn = jax.jit(se_layer, static_argnames=("tile_budget_bytes",))

    def run_case(key, N, C, D, H, W, reduction, budgets):
        kx, k1, k2 = jax.random.split(key, 3)
        hidden = max(1, C // reduction)
        x = jax.random.normal(kx, (N, D, H, W, C), jnp.float32)
        # torch.nn.Linear weights, stored transposed (y @ W.T == y @ w here).
        w1 = (1.0 / np.sqrt(C)) * jax.random.normal(k1, (C, hidden), jnp.float32)
        w2 = (1.0 / np.sqrt(hidden)) * jax.random.normal(k2, (hidden, C), jnp.float32)
        ref = _reference(x, w1, w2)
        for budget in budgets:
            out = jax.block_until_ready(se_fn(x, w1, w2, tile_budget_bytes=budget))
            assert out.shape == x.shape, out.shape
            assert bool(jnp.all(jnp.isfinite(out)))
            err = float(jnp.max(jnp.abs(out - ref)))
            assert err < 1e-4, err

    k0, k1 = jax.random.split(key)
    # PyTorch x would be (N, C, D, H, W) = (2, 128, 8, 8, 8); built channels-last.
    # Default budget -> fully fused single kernel; tiny budget -> tiled two-kernel
    # path (pool/gate accumulator + broadcast scale).
    run_case(k0, N=2, C=128, D=8, H=8, W=8, reduction=16,
             budgets=(4 * 1024 * 1024, 64 * 1024))
    # Non-lane-multiple channel count (masked lanes) to exercise generality.
    run_case(k1, N=2, C=96, D=4, H=4, W=4, reduction=16,
             budgets=(4 * 1024 * 1024,))

    print("KERNEL_OK")
</pallas_src>

<mosaic_0001>
module attributes {stable_mosaic.version = 11 : i64} {
  func.func @_se_fused_kernel(%arg0: i32, %arg1: memref<1x512x128xf32, #tpu.memory_space<vmem>>, %arg2: memref<128x128xf32, #tpu.memory_space<vmem>>, %arg3: memref<128x128xf32, #tpu.memory_space<vmem>>, %arg4: memref<1x512x128xf32, #tpu.memory_space<vmem>>) attributes {dimension_semantics = [#tpu.dimension_semantics<parallel>], iteration_bounds = array<i64: 2>, scalar_prefetch = 0 : i64, scratch_operands = 0 : i64, tpu.core_type = #tpu.core_type<tc>, window_params = [{transform_indices = @transform_0, window_bounds = array<i64: 1, 512, 128>}, {pipeline_mode = #tpu.pipeline_mode<synchronous>, transform_indices = @transform_1, window_bounds = array<i64: 128, 128>}, {pipeline_mode = #tpu.pipeline_mode<synchronous>, transform_indices = @transform_2, window_bounds = array<i64: 128, 128>}, {transform_indices = @transform_3, window_bounds = array<i64: 1, 512, 128>}]} {
    %c0 = arith.constant 0 : index
    %c0_0 = arith.constant 0 : index
    %c0_1 = arith.constant 0 : index
    %0 = vector.load %arg1[%c0, %c0_0, %c0_1] : memref<1x512x128xf32, #tpu.memory_space<vmem>>, vector<1x512x128xf32>
    %1 = vector.shape_cast %0 : vector<1x512x128xf32> to vector<512x128xf32>
    %cst = arith.constant dense<0.000000e+00> : vector<128xf32>
    %2 = vector.multi_reduction <add>, %1, %cst [0] : vector<512x128xf32> to vector<128xf32>
    %3 = vector.shape_cast %2 : vector<128xf32> to vector<1x128xf32>
    %cst_2 = arith.constant 0.001953125 : f32
    %4 = vector.broadcast %cst_2 : f32 to vector<1x128xf32>
    %5 = arith.mulf %3, %4 : vector<1x128xf32>
    %c0_3 = arith.constant 0 : index
    %c0_4 = arith.constant 0 : index
    %6 = vector.load %arg2[%c0_3, %c0_4] : memref<128x128xf32, #tpu.memory_space<vmem>>, vector<128x128xf32>
    %c0_5 = arith.constant 0 : index
    %c0_6 = arith.constant 0 : index
    %7 = vector.load %arg3[%c0_5, %c0_6] : memref<128x128xf32, #tpu.memory_space<vmem>>, vector<128x128xf32>
    %8 = vector.shape_cast %5 : vector<1x128xf32> to vector<1x128xf32>
    %9 = vector.broadcast %8 : vector<1x128xf32> to vector<8x128xf32>
    %cst_7 = arith.constant dense<0.000000e+00> : vector<8x128xf32>
    %10 = tpu.matmul %9, %6, %cst_7 {dimension_numbers = #tpu.dot_dimension_numbers<[1], [0], [0], [1], [0, 0, 1, 1], [], []>} : vector<8x128xf32>, vector<128x128xf32>, vector<8x128xf32> -> vector<8x128xf32>
    %cst_8 = arith.constant 0.000000e+00 : f32
    %11 = vector.broadcast %cst_8 : f32 to vector<8x128xf32>
    %12 = arith.maximumf %10, %11 : vector<8x128xf32>
    %cst_9 = arith.constant dense<0.000000e+00> : vector<8x128xf32>
    %13 = tpu.matmul %12, %7, %cst_9 {dimension_numbers = #tpu.dot_dimension_numbers<[1], [0], [0], [1], [0, 0, 1, 1], [], []>} : vector<8x128xf32>, vector<128x128xf32>, vector<8x128xf32> -> vector<8x128xf32>
    %14 = arith.negf %13 : vector<8x128xf32>
    %15 = math.exp %14 : vector<8x128xf32>
    %cst_10 = arith.constant 1.000000e+00 : f32
    %16 = vector.broadcast %cst_10 : f32 to vector<8x128xf32>
    %17 = arith.addf %16, %15 : vector<8x128xf32>
    %18 = arith.divf %16, %17 : vector<8x128xf32>
    %19 = vector.extract_strided_slice %18 {offsets = [0, 0], sizes = [1, 128], strides = [1, 1]} : vector<8x128xf32> to vector<1x128xf32>
    %c0_11 = arith.constant 0 : index
    %c0_12 = arith.constant 0 : index
    %c0_13 = arith.constant 0 : index
    %20 = vector.load %arg1[%c0_11, %c0_12, %c0_13] : memref<1x512x128xf32, #tpu.memory_space<vmem>>, vector<1x512x128xf32>
    %21 = vector.shape_cast %20 : vector<1x512x128xf32> to vector<512x128xf32>
    %22 = vector.broadcast %19 : vector<1x128xf32> to vector<512x128xf32>
    %23 = arith.mulf %21, %22 : vector<512x128xf32>
    %c0_14 = arith.constant 0 : index
    %c0_15 = arith.constant 0 : index
    %c0_16 = arith.constant 0 : index
    %24 = vector.load %arg4[%c0_14, %c0_15, %c0_16] : memref<1x512x128xf32, #tpu.memory_space<vmem>>, vector<1x512x128xf32>
    %25 = vector.shape_cast %24 : vector<1x512x128xf32> to vector<512x128xf32>
    %26 = vector.shape_cast %23 : vector<512x128xf32> to vector<1x512x128xf32>
    tpu.vector_store %arg4[%c0_14, %c0_15, %c0_16], %26 {strides = array<i32>} : memref<1x512x128xf32, #tpu.memory_space<vmem>>, vector<1x512x128xf32>,
    return
  }
  func.func @transform_0(%arg0: i32) -> (i32, i32, i32) {
    %c0_i32 = arith.constant 0 : i32
    %c0_i32_0 = arith.constant 0 : i32
    %c0_i32_1 = arith.constant 0 : i32
    return %arg0, %c0_i32, %c0_i32_0 : i32, i32, i32
  }
  func.func @transform_1(%arg0: i32) -> (i32, i32) {
    %c0_i32 = arith.constant 0 : i32
    %c0_i32_0 = arith.constant 0 : i32
    %c0_i32_1 = arith.constant 0 : i32
    return %c0_i32, %c0_i32_0 : i32, i32
  }
  func.func @transform_2(%arg0: i32) -> (i32, i32) {
    %c0_i32 = arith.constant 0 : i32
    %c0_i32_0 = arith.constant 0 : i32
    %c0_i32_1 = arith.constant 0 : i32
    return %c0_i32, %c0_i32_0 : i32, i32
  }
  func.func @transform_3(%arg0: i32) -> (i32, i32, i32) {
    %c0_i32 = arith.constant 0 : i32
    %c0_i32_0 = arith.constant 0 : i32
    %c0_i32_1 = arith.constant 0 : i32
    return %arg0, %c0_i32, %c0_i32_0 : i32, i32, i32
  }
}

</mosaic_0001>

<llo_original>
// kernel: se_layer.1
$region0: #{se_layer.1}
  #allocation0 [shape = 'u32[]', space=smem, size = 0x4, offset = 0x4, fixed_abs, tag = 'smem constant byte address 0x4 - core index']
  #allocation1 [shape = 'u32[144,128]{1,0:T(1,128)}', space=vmem, size = 0x12000, scoped, tag = 'internal scratch']
  %s0 = inlined_call_operand.hbm [shape: f32[2,512,128], index: 0, kind: input, shape index: {}]
  %s1 = inlined_call_operand.vmem [shape: f32[128,128], index: 1, kind: input, shape index: {}]
  %s2 = inlined_call_operand.vmem [shape: f32[128,128], index: 2, kind: input, shape index: {}]
  %s3 = inlined_call_operand.hbm [shape: f32[2,512,128], index: 3, kind: output, shape index: {}]
  %s4 = sld [smem:[#allocation0]]
  $region49: #{se_layer.1} parent=0
    _
  %s6 = ssub.s32 1, %s4
  %s7 = scalar_select 0, %s6, %s4
  $region1: #{se_layer.1} parent=0
    #allocation2 [shape = 'u8[524288]{0}', space=vmem, size = 0x80000, scoped, tag = 'input window, operand 0']
    #allocation3 [shape = 's32[2]{0}', space=sflag, size = 0x8, scoped, tag = 'scoped memory for se_layer.1']
    #allocation4 [shape = 's32[2]{0}', space=sflag, size = 0x8, scoped, tag = 'scoped memory for se_layer.1']
    #allocation5 [shape = 'u8[524288]{0}', space=vmem, size = 0x80000, scoped, tag = 'output window, operand 0']
    %8 = vsyncpa [#allocation3], 0
    %s9 = scalar_lea.sflag [#allocation3], 1
    %10 = vsyncpa %s9, 0
    %11 = vsyncpa [#allocation4], 0
    %s12 = scalar_lea.sflag [#allocation4], 1
    %13 = vsyncpa %s12, 0
    loop: start=0, step=1, limit=4
    $region2: #{se_layer.1} parent=1 // loop_pre_header
      _
    $region3: #{se_layer.1} parent=1 // loop_header
      %s15 = sphi 0, %s19
      %p16 = scmp.ge.s32.totalorder %s15, 4
      %s25 = sphi 0, %s27
      %s28 = sphi 0, %s25
      %s29 = sphi 0, %s28
      %s45 = sphi 0, %s29
      %s49 = sphi 0, %s49
      %s51 = sphi 0, %s49
      %s52 = sphi 0, %s51
      %s66 = sphi 0, %s52
      %s70 = sphi 0, %s70
      %s72 = sphi 0, %s70
      %s73 = sphi 0, %s72
      %s87 = sphi 0, %s73
      %s93 = sphi 0, %s95
      %s96 = sphi 0, %s93
      %s97 = sphi 0, %s96
      %s113 = sphi 0, %s97
    $region4: #{se_layer.1} parent=1 // loop_header_branch
      %18 = sbr.rel (%p16) target = $region8
    $region5: #{se_layer.1} parent=1 // loop_body
      %s20 = ssub.s32 %s15, 1
      %s21 = ssub.s32 %s15, 2
      %s22 = sadd.s32 %s15, 1
      %s23 = ssub.s32 %s15, %s22
      %p24 = scmp.eq.s32.totalorder %s23, 0
      %s26 = sadd.s32 %s25, 1
      %s27 = scalar_select %p24, %s25, %s26
      %p30 = pneg %p24
      %p31 = scmp.eq.s32.totalorder %s15, 1
      %p32 = por %p30, %p31
      %p33 = scmp.ne.s32.totalorder %s25, %s28
      %p34 = scmp.eq.s32.totalorder %s15, 0
      %p35 = por %p33, %p34
      %p36 = scmp.ne.s32.totalorder %s25, %s28
      %p37 = scmp.eq.s32.totalorder %s20, 1
      %p38 = por %p36, %p37
      %p39 = scmp.ne.s32.totalorder %s28, %s29
      %p40 = scmp.eq.s32.totalorder %s20, 0
      %p41 = por %p39, %p40
      %p42 = scmp.ne.s32.totalorder %s28, %s29
      %p43 = scmp.eq.s32.totalorder %s21, 1
      %p44 = por %p42, %p43
      %p46 = scmp.ne.s32.totalorder %s29, %s45
      %p47 = scmp.eq.s32.totalorder %s21, 0
      %p48 = por %p46, %p47
      %s50 = sadd.s32 %s49, 1
      %p53 = scmp.eq.s32.totalorder %s15, 1
      %p54 = scmp.ne.s32.totalorder %s49, %s51
      %p55 = scmp.eq.s32.totalorder %s15, 0
      %p56 = por %p54, %p55
      %p57 = scmp.ne.s32.totalorder %s49, %s51
      %p58 = scmp.eq.s32.totalorder %s20, 1
      %p59 = por %p57, %p58
      %p60 = scmp.ne.s32.totalorder %s51, %s52
      %p61 = scmp.eq.s32.totalorder %s20, 0
      %p62 = por %p60, %p61
      %p63 = scmp.ne.s32.totalorder %s51, %s52
      %p64 = scmp.eq.s32.totalorder %s21, 1
      %p65 = por %p63, %p64
      %p67 = scmp.ne.s32.totalorder %s52, %s66
      %p68 = scmp.eq.s32.totalorder %s21, 0
      %p69 = por %p67, %p68
      %s71 = sadd.s32 %s70, 1
      %p74 = scmp.eq.s32.totalorder %s15, 1
      %p75 = scmp.ne.s32.totalorder %s70, %s72
      %p76 = scmp.eq.s32.totalorder %s15, 0
      %p77 = por %p75, %p76
      %p78 = scmp.ne.s32.totalorder %s70, %s72
      %p79 = scmp.eq.s32.totalorder %s20, 1
      %p80 = por %p78, %p79
      %p81 = scmp.ne.s32.totalorder %s72, %s73
      %p82 = scmp.eq.s32.totalorder %s20, 0
      %p83 = por %p81, %p82
      %p84 = scmp.ne.s32.totalorder %s72, %s73
      %p85 = scmp.eq.s32.totalorder %s21, 1
      %p86 = por %p84, %p85
      %p88 = scmp.ne.s32.totalorder %s73, %s87
      %p89 = scmp.eq.s32.totalorder %s21, 0
      %p90 = por %p88, %p89
      %s91 = ssub.s32 %s15, %s22
      %p92 = scmp.eq.s32.totalorder %s91, 0
      %s94 = sadd.s32 %s93, 1
      %s95 = scalar_select %p92, %s93, %s94
      %p98 = pneg %p92
      %p99 = scmp.eq.s32.totalorder %s15, 1
      %p100 = por %p98, %p99
      %p101 = scmp.ne.s32.totalorder %s93, %s96
      %p102 = scmp.eq.s32.totalorder %s15, 0
      %p103 = por %p101, %p102
      %p104 = scmp.ne.s32.totalorder %s93, %s96
      %p105 = scmp.eq.s32.totalorder %s20, 1
      %p106 = por %p104, %p105
      %p107 = scmp.ne.s32.totalorder %s96, %s97
      %p108 = scmp.eq.s32.totalorder %s20, 0
      %p109 = por %p107, %p108
      %p110 = scmp.ne.s32.totalorder %s96, %s97
      %p111 = scmp.eq.s32.totalorder %s21, 1
      %p112 = por %p110, %p111
      %p114 = scmp.ne.s32.totalorder %s97, %s113
      %p115 = scmp.eq.s32.totalorder %s21, 0
      %p116 = por %p114, %p115
      %p117 = scmp.le.s32.totalorder 1, %s15
      %p118 = scmp.lt.s32.totalorder %s15, 3
      %p119 = pnand %p117, %p118
      %p120 = pneg %p119
      // Predicated region
      $region9: #{se_layer.1} parent=5 // pred_check
        _
      $region10: #{se_layer.1} parent=5 // pred_check_branch
        %122 = sbr.rel (%p119) target = $region12
      $region11: #{se_layer.1} parent=5 // pred_region
        %s123 = ssub.s32 %s15, 1
        // Predicated region
        $region13: #{se_layer.1} parent=11 // pred_check
          %p124 = pneg %p62
        $region14: #{se_layer.1} parent=11 // pred_check_branch
          %126 = sbr.rel (%p124) target = $region16
        $region15: #{se_layer.1} parent=11 // pred_region
          _
        $region16: #{se_layer.1} parent=11 // pred_fallthru
          _
        // Predicated region
        $region17: #{se_layer.1} parent=11 // pred_check
          %p127 = pneg %p83
        $region18: #{se_layer.1} parent=11 // pred_check_branch
          %129 = sbr.rel (%p127) target = $region20
        $region19: #{se_layer.1} parent=11 // pred_region
          _
        $region20: #{se_layer.1} parent=11 // pred_fallthru
          _
      $region12: #{se_layer.1} parent=5 // pred_fallthru
        _
      %p130 = scmp.lt.s32.totalorder %s15, 2
      // Predicated region
      $region21: #{se_layer.1} parent=5 // pred_check
        %p131 = pneg %p130
      $region22: #{se_layer.1} parent=5 // pred_check_branch
        %133 = sbr.rel (%p131) target = $region24
      $region23: #{se_layer.1} parent=5 // pred_region
        // Predicated region
        $region25: #{se_layer.1} parent=23 // pred_check
          %p134 = pneg %p35
        $region26: #{se_layer.1} parent=23 // pred_check_branch
          %136 = sbr.rel (%p134) target = $region28
        $region27: #{se_layer.1} parent=23 // pred_region
          %s137 = sand.u32 %s25, 1
          %s138 = scalar_lea.sflag [#allocation3], %s137
          %s139 = sand.u32 %s25, 1
          %s140 = smul.addr %s139, 512
          %s141 = scalar_lea.vmem [#allocation2], %s140
          %s143 = ssub.s32 8192, 8192
          %144 = vsyncadd %s138, %s143
          %s145 = smul.addr %s15, 64
          %s146 = smul.addr %s145, 128
          %s147 = scalar_lea.hbm %s0, %s146
          %s148 = sshll.u32 %s141, 4
          %s149 = int_to_ptr.vmem [resolvable:$true] %s148
          %154 = dma.hbm_to_vmem [thread:$0]  %s147, 8192, %s149, %s138, 128, 128, 8
        $region28: #{se_layer.1} parent=23 // pred_fallthru
          _
      $region24: #{se_layer.1} parent=5 // pred_fallthru
        _
      %p155 = scmp.le.s32.totalorder 1, %s15
      %p156 = scmp.lt.s32.totalorder %s15, 3
      %p157 = pnand %p155, %p156
      %p158 = pneg %p157
      // Predicated region
      $region29: #{se_layer.1} parent=5 // pred_check
        _
      $region30: #{se_layer.1} parent=5 // pred_check_branch
        %160 = sbr.rel (%p157) target = $region32
      $region31: #{se_layer.1} parent=5 // pred_region
        %s161 = ssub.s32 %s15, 1
        %s162 = sand.u32 %s28, 1
        %s163 = scalar_lea.sflag [#allocation3], %s162
        %s164 = sand.u32 %s28, 1
        %s165 = smul.addr %s164, 512
        %s166 = scalar_lea.vmem [#allocation2], %s165
        // Predicated region
        $region33: #{se_layer.1} parent=31 // pred_check
          %p167 = pneg %p41
        $region34: #{se_layer.1} parent=31 // pred_check_branch
          %169 = sbr.rel (%p167) target = $region36
        $region35: #{se_layer.1} parent=31 // pred_region
          %170 = dma.done %s163, 8192
        $region36: #{se_layer.1} parent=31 // pred_fallthru
          _
        %s171 = sand.u32 %s28, 1
        %s172 = scalar_lea.sflag [#allocation3], %s171
        %s173 = sand.u32 %s28, 1
        %s174 = smul.addr %s173, 512
        %s175 = scalar_lea.vmem [#allocation2], %s174
        %p176 = pneg %p41
        %p177 = pneg %p38
        %p178 = pneg %p62
        %p179 = pneg %p59
        %p180 = pneg %p83
        %p181 = pneg %p80
        %p182 = pneg %p109
        %p183 = pneg %p106
        %s184 = sand.u32 %s96, 1
        %s185 = scalar_lea.sflag [#allocation4], %s184
        %s186 = sand.u32 %s96, 1
        %s187 = smul.addr %s186, 512
        %s188 = scalar_lea.vmem [#allocation5], %s187
        %v189 = vld [vmem:[%s166] sm:$0xff]
        %v190 = vld [vmem:[%s166 + $0x8] sm:$0xff]
        %v191 = vld [vmem:[%s166 + $0x10] sm:$0xff]
        %v192 = vld [vmem:[%s166 + $0x18] sm:$0xff]
        %v193 = vld [vmem:[%s166 + $0x20] sm:$0xff]
        %v194 = vld [vmem:[%s166 + $0x28] sm:$0xff]
        %v195 = vld [vmem:[%s166 + $0x30] sm:$0xff]
        %v196 = vld [vmem:[%s166 + $0x38] sm:$0xff]
        %v197 = vld [vmem:[%s166 + $0x40] sm:$0xff]
        %v198 = vld [vmem:[%s166 + $0x48] sm:$0xff]
        %v199 = vld [vmem:[%s166 + $0x50] sm:$0xff]
        %v200 = vld [vmem:[%s166 + $0x58] sm:$0xff]
        %v201 = vld [vmem:[%s166 + $0x60] sm:$0xff]
        %v202 = vld [vmem:[%s166 + $0x68] sm:$0xff]
        %v203 = vld [vmem:[%s166 + $0x70] sm:$0xff]
        %v204 = vld [vmem:[%s166 + $0x78] sm:$0xff]
        %v205 = vld [vmem:[%s166 + $0x80] sm:$0xff]
        %v206 = vld [vmem:[%s166 + $0x88] sm:$0xff]
        %v207 = vld [vmem:[%s166 + $0x90] sm:$0xff]
        %v208 = vld [vmem:[%s166 + $0x98] sm:$0xff]
        %v209 = vld [vmem:[%s166 + $0xa0] sm:$0xff]
        %v210 = vld [vmem:[%s166 + $0xa8] sm:$0xff]
        %v211 = vld [vmem:[%s166 + $0xb0] sm:$0xff]
        %v212 = vld [vmem:[%s166 + $0xb8] sm:$0xff]
        %v213 = vld [vmem:[%s166 + $0xc0] sm:$0xff]
        %v214 = vld [vmem:[%s166 + $0xc8] sm:$0xff]
        %v215 = vld [vmem:[%s166 + $0xd0] sm:$0xff]
        %v216 = vld [vmem:[%s166 + $0xd8] sm:$0xff]
        %v217 = vld [vmem:[%s166 + $0xe0] sm:$0xff]
        %v218 = vld [vmem:[%s166 + $0xe8] sm:$0xff]
        %v219 = vld [vmem:[%s166 + $0xf0] sm:$0xff]
        %v220 = vld [vmem:[%s166 + $0xf8] sm:$0xff]
        %v221 = vld [vmem:[%s166 + $0x100] sm:$0xff]
        %v222 = vld [vmem:[%s166 + $0x108] sm:$0xff]
        %v223 = vld [vmem:[%s166 + $0x110] sm:$0xff]
        %v224 = vld [vmem:[%s166 + $0x118] sm:$0xff]
        %v225 = vld [vmem:[%s166 + $0x120] sm:$0xff]
        %v226 = vld [vmem:[%s166 + $0x128] sm:$0xff]
        %v227 = vld [vmem:[%s166 + $0x130] sm:$0xff]
        %v228 = vld [vmem:[%s166 + $0x138] sm:$0xff]
        %v229 = vld [vmem:[%s166 + $0x140] sm:$0xff]
        %v230 = vld [vmem:[%s166 + $0x148] sm:$0xff]
        %v231 = vld [vmem:[%s166 + $0x150] sm:$0xff]
        %v232 = vld [vmem:[%s166 + $0x158] sm:$0xff]
        %v233 = vld [vmem:[%s166 + $0x160] sm:$0xff]
        %v234 = vld [vmem:[%s166 + $0x168] sm:$0xff]
        %v235 = vld [vmem:[%s166 + $0x170] sm:$0xff]
        %v236 = vld [vmem:[%s166 + $0x178] sm:$0xff]
        %v237 = vld [vmem:[%s166 + $0x180] sm:$0xff]
        %v238 = vld [vmem:[%s166 + $0x188] sm:$0xff]
        %v239 = vld [vmem:[%s166 + $0x190] sm:$0xff]
        %v240 = vld [vmem:[%s166 + $0x198] sm:$0xff]
        %v241 = vld [vmem:[%s166 + $0x1a0] sm:$0xff]
        %v242 = vld [vmem:[%s166 + $0x1a8] sm:$0xff]
        %v243 = vld [vmem:[%s166 + $0x1b0] sm:$0xff]
        %v244 = vld [vmem:[%s166 + $0x1b8] sm:$0xff]
        %v245 = vld [vmem:[%s166 + $0x1c0] sm:$0xff]
        %v246 = vld [vmem:[%s166 + $0x1c8] sm:$0xff]
        %v247 = vld [vmem:[%s166 + $0x1d0] sm:$0xff]
        %v248 = vld [vmem:[%s166 + $0x1d8] sm:$0xff]
        %v249 = vld [vmem:[%s166 + $0x1e0] sm:$0xff]
        %v250 = vld [vmem:[%s166 + $0x1e8] sm:$0xff]
        %v251 = vld [vmem:[%s166 + $0x1f0] sm:$0xff]
        %v252 = vld [vmem:[%s166 + $0x1f8] sm:$0xff]
        %v253 = vadd.f32 %v189, %v190
        %v254 = vadd.f32 %v253, %v191
        %v255 = vadd.f32 %v254, %v192
        %v256 = vadd.f32 %v255, %v193
        %v257 = vadd.f32 %v256, %v194
        %v258 = vadd.f32 %v257, %v195
        %v259 = vadd.f32 %v258, %v196
        %v260 = vadd.f32 %v259, %v197
        %v261 = vadd.f32 %v260, %v198
        %v262 = vadd.f32 %v261, %v199
        %v263 = vadd.f32 %v262, %v200
        %v264 = vadd.f32 %v263, %v201
        %v265 = vadd.f32 %v264, %v202
        %v266 = vadd.f32 %v265, %v203
        %v267 = vadd.f32 %v266, %v204
        %v268 = vadd.f32 %v267, %v205
        %v269 = vadd.f32 %v268, %v206
        %v270 = vadd.f32 %v269, %v207
        %v271 = vadd.f32 %v270, %v208
        %v272 = vadd.f32 %v271, %v209
        %v273 = vadd.f32 %v272, %v210
        %v274 = vadd.f32 %v273, %v211
        %v275 = vadd.f32 %v274, %v212
        %v276 = vadd.f32 %v275, %v213
        %v277 = vadd.f32 %v276, %v214
        %v278 = vadd.f32 %v277, %v215
        %v279 = vadd.f32 %v278, %v216
        %v280 = vadd.f32 %v279, %v217
        %v281 = vadd.f32 %v280, %v218
        %v282 = vadd.f32 %v281, %v219
        %v283 = vadd.f32 %v282, %v220
        %v284 = vadd.f32 %v283, %v221
        %v285 = vadd.f32 %v284, %v222
        %v286 = vadd.f32 %v285, %v223
        %v287 = vadd.f32 %v286, %v224
        %v288 = vadd.f32 %v287, %v225
        %v289 = vadd.f32 %v288, %v226
        %v290 = vadd.f32 %v289, %v227
        %v291 = vadd.f32 %v290, %v228
        %v292 = vadd.f32 %v291, %v229
        %v293 = vadd.f32 %v292, %v230
        %v294 = vadd.f32 %v293, %v231
        %v295 = vadd.f32 %v294, %v232
        %v296 = vadd.f32 %v295, %v233
        %v297 = vadd.f32 %v296, %v234
        %v298 = vadd.f32 %v297, %v235
        %v299 = vadd.f32 %v298, %v236
        %v300 = vadd.f32 %v299, %v237
        %v301 = vadd.f32 %v300, %v238
        %v302 = vadd.f32 %v301, %v239
        %v303 = vadd.f32 %v302, %v240
        %v304 = vadd.f32 %v303, %v241
        %v305 = vadd.f32 %v304, %v242
        %v306 = vadd.f32 %v305, %v243
        %v307 = vadd.f32 %v306, %v244
        %v308 = vadd.f32 %v307, %v245
        %v309 = vadd.f32 %v308, %v246
        %v310 = vadd.f32 %v309, %v247
        %v311 = vadd.f32 %v310, %v248
        %v312 = vadd.f32 %v311, %v249
        %v313 = vadd.f32 %v312, %v250
        %v314 = vadd.f32 %v313, %v251
        %v315 = vadd.f32 %v314, %v252
        %v316 = vrot.slane %v315, 4
        %v317 = vadd.f32 %v315, %v316
        %v318 = vrot.slane %v317, 2
        %v319 = vadd.f32 %v317, %v318
        %v320 = vrot.slane %v319, 1
        %v321 = vadd.f32 %v319, %v320
        %v322 = vmul.f32 %v321, 0.001953125
        %v323 = vld [vmem:[%s1] sm:$0xff]
        %v324 = vld [vmem:[%s1 + $0x8] sm:$0xff]
        %v325 = vld [vmem:[%s1 + $0x10] sm:$0xff]
        %v326 = vld [vmem:[%s1 + $0x18] sm:$0xff]
        %v327 = vld [vmem:[%s1 + $0x20] sm:$0xff]
        %v328 = vld [vmem:[%s1 + $0x28] sm:$0xff]
        %v329 = vld [vmem:[%s1 + $0x30] sm:$0xff]
        %v330 = vld [vmem:[%s1 + $0x38] sm:$0xff]
        %v331 = vld [vmem:[%s1 + $0x40] sm:$0xff]
        %v332 = vld [vmem:[%s1 + $0x48] sm:$0xff]
        %v333 = vld [vmem:[%s1 + $0x50] sm:$0xff]
        %v334 = vld [vmem:[%s1 + $0x58] sm:$0xff]
        %v335 = vld [vmem:[%s1 + $0x60] sm:$0xff]
        %v336 = vld [vmem:[%s1 + $0x68] sm:$0xff]
        %v337 = vld [vmem:[%s1 + $0x70] sm:$0xff]
        %v338 = vld [vmem:[%s1 + $0x78] sm:$0xff]
        %v339 = vld [vmem:[%s2] sm:$0xff]
        %v340 = vld [vmem:[%s2 + $0x8] sm:$0xff]
        %v341 = vld [vmem:[%s2 + $0x10] sm:$0xff]
        %v342 = vld [vmem:[%s2 + $0x18] sm:$0xff]
        %v343 = vld [vmem:[%s2 + $0x20] sm:$0xff]
        %v344 = vld [vmem:[%s2 + $0x28] sm:$0xff]
        %v345 = vld [vmem:[%s2 + $0x30] sm:$0xff]
        %v346 = vld [vmem:[%s2 + $0x38] sm:$0xff]
        %v347 = vld [vmem:[%s2 + $0x40] sm:$0xff]
        %v348 = vld [vmem:[%s2 + $0x48] sm:$0xff]
        %v349 = vld [vmem:[%s2 + $0x50] sm:$0xff]
        %v350 = vld [vmem:[%s2 + $0x58] sm:$0xff]
        %v351 = vld [vmem:[%s2 + $0x60] sm:$0xff]
        %v352 = vld [vmem:[%s2 + $0x68] sm:$0xff]
        %v353 = vld [vmem:[%s2 + $0x70] sm:$0xff]
        %v354 = vld [vmem:[%s2 + $0x78] sm:$0xff]
        %355 = vmatprep.subr.mxu0 0.0
        %356 = vmatpush1.msra.mxu0 %v323
        %357 = vmatprep.subr.mxu0 0.0
        %358 = vmatpush1.msra.mxu0 %v324
        %359 = vmatprep.subr.mxu0 0.0
        %360 = vmatpush1.msra.mxu0 %v325
        %361 = vmatprep.subr.mxu0 0.0
        %362 = vmatpush1.msra.mxu0 %v326
        %363 = vmatprep.subr.mxu0 0.0
        %364 = vmatpush1.msra.mxu0 %v327
        %365 = vmatprep.subr.mxu0 0.0
        %366 = vmatpush1.msra.mxu0 %v328
        %367 = vmatprep.subr.mxu0 0.0
        %368 = vmatpush1.msra.mxu0 %v329
        %369 = vmatprep.subr.mxu0 0.0
        %370 = vmatpush1.msra.mxu0 %v330
        %371 = vmatprep.subr.mxu0 0.0
        %372 = vmatpush1.msra.mxu0 %v331
        %373 = vmatprep.subr.mxu0 0.0
        %374 = vmatpush1.msra.mxu0 %v332
        %375 = vmatprep.subr.mxu0 0.0
        %376 = vmatpush1.msra.mxu0 %v333
        %377 = vmatprep.subr.mxu0 0.0
        %378 = vmatpush1.msra.mxu0 %v334
        %379 = vmatprep.subr.mxu0 0.0
        %380 = vmatpush1.msra.mxu0 %v335
        %381 = vmatprep.subr.mxu0 0.0
        %382 = vmatpush1.msra.mxu0 %v336
        %383 = vmatprep.subr.mxu0 0.0
        %384 = vmatpush1.msra.mxu0 %v337
        %385 = vmatprep.subr.mxu0 0.0
        %386 = vmatpush1.msra.mxu0 %v338
        %387 = vmatprep.subr.mxu0 0.0
        %388 = vmatpush1.msra.mxu0 0.0
        %389 = vmatprep.subr.mxu0 0.0
        %390 = vmatpush1.msra.mxu0 0.0
        %391 = vmatprep.subr.mxu0 0.0
        %392 = vmatpush1.msra.mxu0 0.0
        %393 = vmatprep.subr.mxu0 0.0
        %394 = vmatpush1.msra.mxu0 0.0
        %395 = vmatprep.subr.mxu0 0.0
        %396 = vmatpush1.msra.mxu0 0.0
        %397 = vmatprep.subr.mxu0 0.0
        %398 = vmatpush1.msra.mxu0 0.0
        %399 = vmatprep.subr.mxu0 0.0
        %400 = vmatpush1.msra.mxu0 0.0
        %401 = vmatprep.subr.mxu0 0.0
        %402 = vmatpush1.msra.mxu0 0.0
        %403 = vmatprep.subr.mxu0 0.0
        %404 = vmatpush1.msra.mxu0 0.0
        %405 = vmatprep.subr.mxu0 0.0
        %406 = vmatpush1.msra.mxu0 0.0
        %407 = vmatprep.subr.mxu0 0.0
        %408 = vmatpush1.msra.mxu0 0.0
        %409 = vmatprep.subr.mxu0 0.0
        %410 = vmatpush1.msra.mxu0 0.0
        %411 = vmatprep.subr.mxu0 0.0
        %412 = vmatpush1.msra.mxu0 0.0
        %413 = vmatprep.subr.mxu0 0.0
        %414 = vmatpush1.msra.mxu0 0.0
        %415 = vmatprep.subr.mxu0 0.0
        %416 = vmatpush1.msra.mxu0 0.0
        %417 = vmatprep.subr.mxu0 0.0
        %418 = vmatpush1.msra.mxu0 0.0
        %419 = vmatprep.mubr.f32.mxu0 0.0
        %420 = vmatmul.mubr.f32.gmra.mrb[0].mxu0 %v322
        %v421 = vpop.f32.mrb[0].mxu0
        %v422 = vadd.f32 0.0, %v421
        %v423 = vpop.f32.mrb[0].mxu0
        %424 = vdwg.mxu0
        %v425 = vmax.f32 %v422, 0.0
        %426 = vmatprep.subr.mxu0 0.0
        %427 = vmatpush1.msra.mxu0 %v339
        %428 = vmatprep.subr.mxu0 0.0
        %429 = vmatpush1.msra.mxu0 %v340
        %430 = vmatprep.subr.mxu0 0.0
        %431 = vmatpush1.msra.mxu0 %v341
        %432 = vmatprep.subr.mxu0 0.0
        %433 = vmatpush1.msra.mxu0 %v342
        %434 = vmatprep.subr.mxu0 0.0
        %435 = vmatpush1.msra.mxu0 %v343
        %436 = vmatprep.subr.mxu0 0.0
        %437 = vmatpush1.msra.mxu0 %v344
        %438 = vmatprep.subr.mxu0 0.0
        %439 = vmatpush1.msra.mxu0 %v345
        %440 = vmatprep.subr.mxu0 0.0
        %441 = vmatpush1.msra.mxu0 %v346
        %442 = vmatprep.subr.mxu0 0.0
        %443 = vmatpush1.msra.mxu0 %v347
        %444 = vmatprep.subr.mxu0 0.0
        %445 = vmatpush1.msra.mxu0 %v348
        %446 = vmatprep.subr.mxu0 0.0
        %447 = vmatpush1.msra.mxu0 %v349
        %448 = vmatprep.subr.mxu0 0.0
        %449 = vmatpush1.msra.mxu0 %v350
        %450 = vmatprep.subr.mxu0 0.0
        %451 = vmatpush1.msra.mxu0 %v351
        %452 = vmatprep.subr.mxu0 0.0
        %453 = vmatpush1.msra.mxu0 %v352
        %454 = vmatprep.subr.mxu0 0.0
        %455 = vmatpush1.msra.mxu0 %v353
        %456 = vmatprep.subr.mxu0 0.0
        %457 = vmatpush1.msra.mxu0 %v354
        %458 = vmatprep.subr.mxu0 0.0
        %459 = vmatpush1.msra.mxu0 0.0
        %460 = vmatprep.subr.mxu0 0.0
        %461 = vmatpush1.msra.mxu0 0.0
        %462 = vmatprep.subr.mxu0 0.0
        %463 = vmatpush1.msra.mxu0 0.0
        %464 = vmatprep.subr.mxu0 0.0
        %465 = vmatpush1.msra.mxu0 0.0
        %466 = vmatprep.subr.mxu0 0.0
        %467 = vmatpush1.msra.mxu0 0.0
        %468 = vmatprep.subr.mxu0 0.0
        %469 = vmatpush1.msra.mxu0 0.0
        %470 = vmatprep.subr.mxu0 0.0
        %471 = vmatpush1.msra.mxu0 0.0
        %472 = vmatprep.subr.mxu0 0.0
        %473 = vmatpush1.msra.mxu0 0.0
        %474 = vmatprep.subr.mxu0 0.0
        %475 = vmatpush1.msra.mxu0 0.0
        %476 = vmatprep.subr.mxu0 0.0
        %477 = vmatpush1.msra.mxu0 0.0
        %478 = vmatprep.subr.mxu0 0.0
        %479 = vmatpush1.msra.mxu0 0.0
        %480 = vmatprep.subr.mxu0 0.0
        %481 = vmatpush1.msra.mxu0 0.0
        %482 = vmatprep.subr.mxu0 0.0
        %483 = vmatpush1.msra.mxu0 0.0
        %484 = vmatprep.subr.mxu0 0.0
        %485 = vmatpush1.msra.mxu0 0.0
        %486 = vmatprep.subr.mxu0 0.0
        %487 = vmatpush1.msra.mxu0 0.0
        %488 = vmatprep.subr.mxu0 0.0
        %489 = vmatpush1.msra.mxu0 0.0
        %490 = vmatprep.mubr.f32.mxu0 0.0
        %491 = vmatmul.mubr.f32.gmra.mrb[0].mxu0 %v425
        %v492 = vpop.f32.mrb[0].mxu0
        %v493 = vadd.f32 0.0, %v492
        %v494 = vpop.f32.mrb[0].mxu0
        %495 = vdwg.mxu0
        %v496 = vxor.u32 %v493, 2147483648
        %v497 = vmul.f32 %v496, 1.442695
        %v498 = vpow.pop %v497
        %v499 = vadd.f32 %v498, 1.0
        %v500 = vrcp.pop %v499
        %v501 = vmul.f32 1.0, %v500
        %v502 = vlaneseq
        %v503 = vshrl.u32 %v502, 7
        %v504 = vsub.s32 0, %v503
        %v505 = vrot.slane %v501, %v504
        %v506 = vmul.f32 %v189, %v505
        %v507 = vmul.f32 %v190, %v505
        %v508 = vmul.f32 %v191, %v505
        %v509 = vmul.f32 %v192, %v505
        %v510 = vmul.f32 %v193, %v505
        %v511 = vmul.f32 %v194, %v505
        %v512 = vmul.f32 %v195, %v505
        %v513 = vmul.f32 %v196, %v505
        %v514 = vmul.f32 %v197, %v505
        %v515 = vmul.f32 %v198, %v505
        %v516 = vmul.f32 %v199, %v505
        %v517 = vmul.f32 %v200, %v505
        %v518 = vmul.f32 %v201, %v505
        %v519 = vmul.f32 %v202, %v505
        %v520 = vmul.f32 %v203, %v505
        %v521 = vmul.f32 %v204, %v505
        %v522 = vmul.f32 %v205, %v505
        %v523 = vmul.f32 %v206, %v505
        %v524 = vmul.f32 %v207, %v505
        %v525 = vmul.f32 %v208, %v505
        %v526 = vmul.f32 %v209, %v505
        %v527 = vmul.f32 %v210, %v505
        %v528 = vmul.f32 %v211, %v505
        %v529 = vmul.f32 %v212, %v505
        %v530 = vmul.f32 %v213, %v505
        %v531 = vmul.f32 %v214, %v505
        %v532 = vmul.f32 %v215, %v505
        %v533 = vmul.f32 %v216, %v505
        %v534 = vmul.f32 %v217, %v505
        %v535 = vmul.f32 %v218, %v505
        %v536 = vmul.f32 %v219, %v505
        %v537 = vmul.f32 %v220, %v505
        %v538 = vmul.f32 %v221, %v505
        %v539 = vmul.f32 %v222, %v505
        %v540 = vmul.f32 %v223, %v505
        %v541 = vmul.f32 %v224, %v505
        %v542 = vmul.f32 %v225, %v505
        %v543 = vmul.f32 %v226, %v505
        %v544 = vmul.f32 %v227, %v505
        %v545 = vmul.f32 %v228, %v505
        %v546 = vmul.f32 %v229, %v505
        %v547 = vmul.f32 %v230, %v505
        %v548 = vmul.f32 %v231, %v505
        %v549 = vmul.f32 %v232, %v505
        %v550 = vmul.f32 %v233, %v505
        %v551 = vmul.f32 %v234, %v505
        %v552 = vmul.f32 %v235, %v505
        %v553 = vmul.f32 %v236, %v505
        %v554 = vmul.f32 %v237, %v505
        %v555 = vmul.f32 %v238, %v505
        %v556 = vmul.f32 %v239, %v505
        %v557 = vmul.f32 %v240, %v505
        %v558 = vmul.f32 %v241, %v505
        %v559 = vmul.f32 %v242, %v505
        %v560 = vmul.f32 %v243, %v505
        %v561 = vmul.f32 %v244, %v505
        %v562 = vmul.f32 %v245, %v505
        %v563 = vmul.f32 %v246, %v505
        %v564 = vmul.f32 %v247, %v505
        %v565 = vmul.f32 %v248, %v505
        %v566 = vmul.f32 %v249, %v505
        %v567 = vmul.f32 %v250, %v505
        %v568 = vmul.f32 %v251, %v505
        %v569 = vmul.f32 %v252, %v505
        %570 = vst [vmem:[%s188] sm:$0xff] %v506
        %571 = vst [vmem:[%s188 + $0x8] sm:$0xff] %v507
        %572 = vst [vmem:[%s188 + $0x10] sm:$0xff] %v508
        %573 = vst [vmem:[%s188 + $0x18] sm:$0xff] %v509
        %574 = vst [vmem:[%s188 + $0x20] sm:$0xff] %v510
        %575 = vst [vmem:[%s188 + $0x28] sm:$0xff] %v511
        %576 = vst [vmem:[%s188 + $0x30] sm:$0xff] %v512
        %577 = vst [vmem:[%s188 + $0x38] sm:$0xff] %v513
        %578 = vst [vmem:[%s188 + $0x40] sm:$0xff] %v514
        %579 = vst [vmem:[%s188 + $0x48] sm:$0xff] %v515
        %580 = vst [vmem:[%s188 + $0x50] sm:$0xff] %v516
        %581 = vst [vmem:[%s188 + $0x58] sm:$0xff] %v517
        %582 = vst [vmem:[%s188 + $0x60] sm:$0xff] %v518
        %583 = vst [vmem:[%s188 + $0x68] sm:$0xff] %v519
        %584 = vst [vmem:[%s188 + $0x70] sm:$0xff] %v520
        %585 = vst [vmem:[%s188 + $0x78] sm:$0xff] %v521
        %586 = vst [vmem:[%s188 + $0x80] sm:$0xff] %v522
        %587 = vst [vmem:[%s188 + $0x88] sm:$0xff] %v523
        %588 = vst [vmem:[%s188 + $0x90] sm:$0xff] %v524
        %589 = vst [vmem:[%s188 + $0x98] sm:$0xff] %v525
        %590 = vst [vmem:[%s188 + $0xa0] sm:$0xff] %v526
        %591 = vst [vmem:[%s188 + $0xa8] sm:$0xff] %v527
        %592 = vst [vmem:[%s188 + $0xb0] sm:$0xff] %v528
        %593 = vst [vmem:[%s188 + $0xb8] sm:$0xff] %v529
        %594 = vst [vmem:[%s188 + $0xc0] sm:$0xff] %v530
        %595 = vst [vmem:[%s188 + $0xc8] sm:$0xff] %v531
        %596 = vst [vmem:[%s188 + $0xd0] sm:$0xff] %v532
        %597 = vst [vmem:[%s188 + $0xd8] sm:$0xff] %v533
        %598 = vst [vmem:[%s188 + $0xe0] sm:$0xff] %v534
        %599 = vst [vmem:[%s188 + $0xe8] sm:$0xff] %v535
        %600 = vst [vmem:[%s188 + $0xf0] sm:$0xff] %v536
        %601 = vst [vmem:[%s188 + $0xf8] sm:$0xff] %v537
        %602 = vst [vmem:[%s188 + $0x100] sm:$0xff] %v538
        %603 = vst [vmem:[%s188 + $0x108] sm:$0xff] %v539
        %604 = vst [vmem:[%s188 + $0x110] sm:$0xff] %v540
        %605 = vst [vmem:[%s188 + $0x118] sm:$0xff] %v541
        %606 = vst [vmem:[%s188 + $0x120] sm:$0xff] %v542
        %607 = vst [vmem:[%s188 + $0x128] sm:$0xff] %v543
        %608 = vst [vmem:[%s188 + $0x130] sm:$0xff] %v544
        %609 = vst [vmem:[%s188 + $0x138] sm:$0xff] %v545
        %610 = vst [vmem:[%s188 + $0x140] sm:$0xff] %v546
        %611 = vst [vmem:[%s188 + $0x148] sm:$0xff] %v547
        %612 = vst [vmem:[%s188 + $0x150] sm:$0xff] %v548
        %613 = vst [vmem:[%s188 + $0x158] sm:$0xff] %v549
        %614 = vst [vmem:[%s188 + $0x160] sm:$0xff] %v550
        %615 = vst [vmem:[%s188 + $0x168] sm:$0xff] %v551
        %616 = vst [vmem:[%s188 + $0x170] sm:$0xff] %v552
        %617 = vst [vmem:[%s188 + $0x178] sm:$0xff] %v553
        %618 = vst [vmem:[%s188 + $0x180] sm:$0xff] %v554
        %619 = vst [vmem:[%s188 + $0x188] sm:$0xff] %v555
        %620 = vst [vmem:[%s188 + $0x190] sm:$0xff] %v556
        %621 = vst [vmem:[%s188 + $0x198] sm:$0xff] %v557
        %622 = vst [vmem:[%s188 + $0x1a0] sm:$0xff] %v558
        %623 = vst [vmem:[%s188 + $0x1a8] sm:$0xff] %v559
        %624 = vst [vmem:[%s188 + $0x1b0] sm:$0xff] %v560
        %625 = vst [vmem:[%s188 + $0x1b8] sm:$0xff] %v561
        %626 = vst [vmem:[%s188 + $0x1c0] sm:$0xff] %v562
        %627 = vst [vmem:[%s188 + $0x1c8] sm:$0xff] %v563
        %628 = vst [vmem:[%s188 + $0x1d0] sm:$0xff] %v564
        %629 = vst [vmem:[%s188 + $0x1d8] sm:$0xff] %v565
        %630 = vst [vmem:[%s188 + $0x1e0] sm:$0xff] %v566
        %631 = vst [vmem:[%s188 + $0x1e8] sm:$0xff] %v567
        %632 = vst [vmem:[%s188 + $0x1f0] sm:$0xff] %v568
        %633 = vst [vmem:[%s188 + $0x1f8] sm:$0xff] %v569
        %s634 = sand.u32 %s96, 1
        %s635 = scalar_lea.sflag [#allocation4], %s634
        %s636 = sand.u32 %s96, 1
        %s637 = smul.addr %s636, 512
        %s638 = scalar_lea.vmem [#allocation5], %s637
        // Predicated region
        $region37: #{se_layer.1} parent=31 // pred_check
          %p639 = pneg %p106
        $region38: #{se_layer.1} parent=31 // pred_check_branch
          %641 = sbr.rel (%p639) target = $region40
        $region39: #{se_layer.1} parent=31 // pred_region
          %s643 = ssub.s32 8192, 8192
          %644 = vsyncadd %s635, %s643
          %s645 = smul.addr %s20, 64
          %s646 = smul.addr %s645, 128
          %s647 = scalar_lea.hbm %s3, %s646
          %s648 = sshll.u32 %s638, 4
          %s649 = int_to_ptr.vmem [resolvable:$true] %s648
          %654 = dma.vmem_to_hbm [thread:$0]  %s649, 8192, %s647, %s635, 128, 128, 8
        $region40: #{se_layer.1} parent=31 // pred_fallthru
          _
      $region32: #{se_layer.1} parent=5 // pred_fallthru
        _
      %p655 = scmp.le.s32.totalorder 2, %s15
      // Predicated region
      $region41: #{se_layer.1} parent=5 // pred_check
        %p656 = pneg %p655
      $region42: #{se_layer.1} parent=5 // pred_check_branch
        %658 = sbr.rel (%p656) target = $region44
      $region43: #{se_layer.1} parent=5 // pred_region
        %s659 = ssub.s32 %s15, 2
        // Predicated region
        $region45: #{se_layer.1} parent=43 // pred_check
          %p660 = pneg %p112
        $region46: #{se_layer.1} parent=43 // pred_check_branch
          %662 = sbr.rel (%p660) target = $region48
        $region47: #{se_layer.1} parent=43 // pred_region
          %s663 = sand.u32 %s97, 1
          %s664 = scalar_lea.sflag [#allocation4], %s663
          %s665 = sand.u32 %s97, 1
          %s666 = smul.addr %s665, 512
          %s667 = scalar_lea.vmem [#allocation5], %s666
          %668 = dma.done %s664, 8192
        $region48: #{se_layer.1} parent=43 // pred_fallthru
          _
      $region44: #{se_layer.1} parent=5 // pred_fallthru
        _
    $region6: #{se_layer.1} parent=1 // loop_footer
      %s19 = sadd.s32 1, %s15
    $region7: #{se_layer.1} parent=1 // loop_footer_branch
      %14 = sbr.rel target = $region3
    $region8: #{se_layer.1} parent=1 // loop_exit
      _
    %669 = vsyncpa [#allocation3], 1
    %s670 = scalar_lea.sflag [#allocation3], 1
    %671 = vsyncpa %s670, 1
    %672 = vsyncpa [#allocation4], 1
    %s673 = scalar_lea.sflag [#allocation4], 1
    %674 = vsyncpa %s673, 1

</llo_original>
